<compile_context>
chip_gen: v6e
topology: v6e:2x2x1
jax: 0.10.0
libtpu: 0.0.40
codegen_flags: <defaults>
</compile_context>

<pallas_src>
import functools

import jax
import jax.numpy as jnp
from jax.experimental import pallas as pl
from jax.experimental.pallas import tpu as pltpu


def _round_up(x, m):
    return ((x + m - 1) // m) * m


# ---------------------------------------------------------------------------
# Kernels
# ---------------------------------------------------------------------------

def _lambda_train_kernel(x_ref, w_ref, b_ref, eps_ref, z_ref, *, lp):
    # Single MXU dot over the packed (H, 2*lp) weight; bias add on the VPU.
    y = jnp.dot(x_ref[...], w_ref[...],
                preferred_element_type=jnp.float32) + b_ref[...]
    mean = y[:, :lp]          # lane-group-aligned slice (lp is a multiple of 128)
    logvar_half = y[:, lp:]   # 0.5 * logvar (0.5 folded into packed params)
    std = jnp.exp(logvar_half)                 # EUP transcendental
    z_ref[...] = eps_ref[...] * std + mean     # reparameterization, fused in-vreg


def _lambda_eval_kernel(x_ref, w_ref, b_ref, z_ref):
    z_ref[...] = (jnp.dot(x_ref[...], w_ref[...],
                          preferred_element_type=jnp.float32) + b_ref[...])


# ---------------------------------------------------------------------------
# Parameter packing (one-time transform) and wrapper
# ---------------------------------------------------------------------------

def init_params(key, hidden_size, latent_length):
    """Matches PyTorch: xavier_uniform_ weights, default Linear bias init."""
    ks = jax.random.split(key, 4)
    xav = (6.0 / (hidden_size + latent_length)) ** 0.5
    kb = 1.0 / (hidden_size ** 0.5)
    u = lambda k, shape, s: jax.random.uniform(k, shape, jnp.float32, -s, s)
    return dict(
        w_mean=u(ks[0], (hidden_size, latent_length), xav),    # hidden_to_mean.weight^T
        b_mean=u(ks[1], (1, latent_length), kb),                # hidden_to_mean.bias
        w_logvar=u(ks[2], (hidden_size, latent_length), xav),   # hidden_to_logvar.weight^T
        b_logvar=u(ks[3], (1, latent_length), kb),              # hidden_to_logvar.bias
    )


def pack_params(params):
    """One-time transform: pad each head to 128 lanes, fold the 0.5 into the
    logvar head, and concatenate into a single (H, 2*128) weight / (1, 2*128)
    bias so the kernel needs exactly one MXU dot."""
    H, L = params["w_mean"].shape
    lp = _round_up(L, 128)

    def pad_l(a):  # pad last dim L -> lp with zeros
        return jnp.pad(a, ((0, 0), (0, lp - L)))

    w_pack = jnp.concatenate(
        [pad_l(params["w_mean"]), pad_l(0.5 * params["w_logvar"])], axis=1)
    b_pack = jnp.concatenate(
        [pad_l(params["b_mean"]), pad_l(0.5 * params["b_logvar"])], axis=1)
    return dict(w_pack=w_pack, b_pack=b_pack, hidden_size=H,
                latent_length=L, lp=lp)


def _choose_batch_tile(B, H, lp):
    # VMEM per batch row: double-buffered f32 x (H), eps (lp) and z (lp) tiles.
    per_row = 4 * 2 * (H + 2 * lp)
    budget = 24 << 20          # headroom under v7x's 32 MiB default scoped VMEM
    tb = max(8, min(512, (budget // per_row) // 8 * 8))
    tb = min(tb, _round_up(B, 8))
    # Guarantee >= 2 grid steps on the "parallel" batch axis when B permits,
    # so both v7x TensorCores get work (no effect on single-TC v5e/v6e).
    if _round_up(B, tb) // tb < 2 and B > 8:
        tb = _round_up((B + 1) // 2, 8)
    return tb


def lambda_forward(cell_output, packed, *, training=True, eps=None):
    """Pallas implementation of Lambda.forward.

    cell_output: (B, H) float32
    packed: output of pack_params()
    eps: (B, L) standard-normal noise, required iff training=True.
    """
    B, H = cell_output.shape
    assert H == packed["hidden_size"]
    L, lp = packed["latent_length"], packed["lp"]

    tb = _choose_batch_tile(B, H, lp)
    Bp = _round_up(B, tb)
    x = cell_output
    if Bp != B:
        x = jnp.pad(x, ((0, Bp - B), (0, 0)))

    grid = (Bp // tb,)
    x_spec = pl.BlockSpec((tb, H), lambda i: (i, 0))
    z_spec = pl.BlockSpec((tb, lp), lambda i: (i, 0))   # lane-dense output block
    cparams = pltpu.CompilerParams(dimension_semantics=("parallel",))

    if training:
        if eps is None:
            raise ValueError("training=True requires eps of shape (B, L)")
        # Lane-dense eps: pad rows to Bp and lanes to lp (zeros are harmless:
        # padded lanes give eps=0 * exp(0) + 0 = 0 and are sliced away).
        e = jnp.pad(eps, ((0, Bp - B), (0, lp - L)))
        w_spec = pl.BlockSpec((H, 2 * lp), lambda i: (0, 0))
        b_spec = pl.BlockSpec((1, 2 * lp), lambda i: (0, 0))
        z = pl.pallas_call(
            functools.partial(_lambda_train_kernel, lp=lp),
            out_shape=jax.ShapeDtypeStruct((Bp, lp), jnp.float32),
            grid=grid,
            in_specs=[x_spec, w_spec, b_spec, z_spec],
            out_specs=z_spec,
            compiler_params=cparams,
        )(x, packed["w_pack"], packed["b_pack"], e)
    else:
        # Eval only needs the mean head: use the lane-aligned first half of the
        # packed params (cheap XLA-level slice outside the kernel).
        w_spec = pl.BlockSpec((H, lp), lambda i: (0, 0))
        b_spec = pl.BlockSpec((1, lp), lambda i: (0, 0))
        z = pl.pallas_call(
            _lambda_eval_kernel,
            out_shape=jax.ShapeDtypeStruct((Bp, lp), jnp.float32),
            grid=grid,
            in_specs=[x_spec, w_spec, b_spec],
            out_specs=z_spec,
            compiler_params=cparams,
        )(x, packed["w_pack"][:, :lp], packed["b_pack"][:, :lp])

    return z[:B, :L]


def reference_forward(cell_output, p, *, training=True, eps=None):
    mean = cell_output @ p["w_mean"] + p["b_mean"]
    if not training:
        return mean
    logvar = cell_output @ p["w_logvar"] + p["b_logvar"]
    return eps * jnp.exp(0.5 * logvar) + mean


if __name__ == "__main__":
    # cell_output in the VRAE is the encoder's final hidden state: (batch, hidden_size).
    batch = 8
    hidden_size = 32
    latent_length = 16

    key = jax.random.PRNGKey(0)
    pkey, xkey, ekey = jax.random.split(key, 3)
    params = init_params(pkey, hidden_size, latent_length)
    packed = pack_params(params)   # one-time parameter transform
    cell_output = jax.random.normal(xkey, (batch, hidden_size), jnp.float32)
    # TODO(synk): torch.randn_like noise is drawn host-side with jax.random.normal
    # and passed into the kernel; an in-kernel pltpu.prng_seed/stateful_normal draw
    # would save the (B, lp) HBM read but lose bit-for-bit parity with the
    # pure-JAX reference used below.
    eps = jax.random.normal(ekey, (batch, latent_length), jnp.float32)

    z_train = jax.block_until_ready(
        lambda_forward(cell_output, packed, training=True, eps=eps))
    z_eval = jax.block_until_ready(
        lambda_forward(cell_output, packed, training=False))

    ref_train = reference_forward(cell_output, params, training=True, eps=eps)
    ref_eval = reference_forward(cell_output, params, training=False)

    assert z_train.shape == (batch, latent_length), z_train.shape
    assert z_eval.shape == (batch, latent_length), z_eval.shape
    assert jnp.allclose(z_train, ref_train, rtol=1e-5, atol=1e-5), "train mismatch"
    assert jnp.allclose(z_eval, ref_eval, rtol=1e-5, atol=1e-5), "eval mismatch"

    print("KERNEL_OK")
</pallas_src>

<mosaic_0001>
module attributes {stable_mosaic.version = 11 : i64} {
  func.func @_lambda_train_kernel(%arg0: i32, %arg1: memref<8x32xf32, #tpu.memory_space<vmem>>, %arg2: memref<32x256xf32, #tpu.memory_space<vmem>>, %arg3: memref<1x256xf32, #tpu.memory_space<vmem>>, %arg4: memref<8x128xf32, #tpu.memory_space<vmem>>, %arg5: memref<8x128xf32, #tpu.memory_space<vmem>>) attributes {dimension_semantics = [#tpu.dimension_semantics<parallel>], iteration_bounds = array<i64: 1>, scalar_prefetch = 0 : i64, scratch_operands = 0 : i64, tpu.core_type = #tpu.core_type<tc>, window_params = [{transform_indices = @transform_0, window_bounds = array<i64: 8, 32>}, {pipeline_mode = #tpu.pipeline_mode<synchronous>, transform_indices = @transform_1, window_bounds = array<i64: 32, 256>}, {pipeline_mode = #tpu.pipeline_mode<synchronous>, transform_indices = @transform_2, window_bounds = array<i64: 1, 256>}, {transform_indices = @transform_3, window_bounds = array<i64: 8, 128>}, {transform_indices = @transform_4, window_bounds = array<i64: 8, 128>}]} {
    %c0 = arith.constant 0 : index
    %c0_0 = arith.constant 0 : index
    %0 = vector.load %arg1[%c0, %c0_0] : memref<8x32xf32, #tpu.memory_space<vmem>>, vector<8x32xf32>
    %c0_1 = arith.constant 0 : index
    %c0_2 = arith.constant 0 : index
    %1 = vector.load %arg2[%c0_1, %c0_2] : memref<32x256xf32, #tpu.memory_space<vmem>>, vector<32x256xf32>
    %cst = arith.constant dense<0.000000e+00> : vector<8x256xf32>
    %2 = tpu.matmul %0, %1, %cst {dimension_numbers = #tpu.dot_dimension_numbers<[1], [0], [0], [1], [0, 0, 1, 1], [], []>} : vector<8x32xf32>, vector<32x256xf32>, vector<8x256xf32> -> vector<8x256xf32>
    %c0_3 = arith.constant 0 : index
    %c0_4 = arith.constant 0 : index
    %3 = vector.load %arg3[%c0_3, %c0_4] : memref<1x256xf32, #tpu.memory_space<vmem>>, vector<1x256xf32>
    %4 = vector.broadcast %3 : vector<1x256xf32> to vector<8x256xf32>
    %5 = arith.addf %2, %4 : vector<8x256xf32>
    %6 = vector.extract_strided_slice %5 {offsets = [0, 0], sizes = [8, 128], strides = [1, 1]} : vector<8x256xf32> to vector<8x128xf32>
    %7 = vector.extract_strided_slice %5 {offsets = [0, 128], sizes = [8, 128], strides = [1, 1]} : vector<8x256xf32> to vector<8x128xf32>
    %8 = math.exp %7 : vector<8x128xf32>
    %c0_5 = arith.constant 0 : index
    %c0_6 = arith.constant 0 : index
    %9 = vector.load %arg4[%c0_5, %c0_6] : memref<8x128xf32, #tpu.memory_space<vmem>>, vector<8x128xf32>
    %10 = arith.mulf %9, %8 : vector<8x128xf32>
    %11 = arith.addf %10, %6 : vector<8x128xf32>
    %c0_7 = arith.constant 0 : index
    %c0_8 = arith.constant 0 : index
    %12 = vector.load %arg5[%c0_7, %c0_8] : memref<8x128xf32, #tpu.memory_space<vmem>>, vector<8x128xf32>
    tpu.vector_store %arg5[%c0_7, %c0_8], %11 {strides = array<i32>} : memref<8x128xf32, #tpu.memory_space<vmem>>, vector<8x128xf32>,
    return
  }
  func.func @transform_0(%arg0: i32) -> (i32, i32) {
    %c0_i32 = arith.constant 0 : i32
    %c0_i32_0 = arith.constant 0 : i32
    return %arg0, %c0_i32 : i32, i32
  }
  func.func @transform_1(%arg0: i32) -> (i32, i32) {
    %c0_i32 = arith.constant 0 : i32
    %c0_i32_0 = arith.constant 0 : i32
    %c0_i32_1 = arith.constant 0 : i32
    return %c0_i32, %c0_i32_0 : i32, i32
  }
  func.func @transform_2(%arg0: i32) -> (i32, i32) {
    %c0_i32 = arith.constant 0 : i32
    %c0_i32_0 = arith.constant 0 : i32
    %c0_i32_1 = arith.constant 0 : i32
    return %c0_i32, %c0_i32_0 : i32, i32
  }
  func.func @transform_3(%arg0: i32) -> (i32, i32) {
    %c0_i32 = arith.constant 0 : i32
    %c0_i32_0 = arith.constant 0 : i32
    return %arg0, %c0_i32 : i32, i32
  }
  func.func @transform_4(%arg0: i32) -> (i32, i32) {
    %c0_i32 = arith.constant 0 : i32
    %c0_i32_0 = arith.constant 0 : i32
    return %arg0, %c0_i32 : i32, i32
  }
}

</mosaic_0001>

<llo_original>
// kernel: tpu_custom_call.1
$region0: #{tpu_custom_call.1}
  #allocation0 [shape = 'u32[]', space=smem, size = 0x4, offset = 0x4, fixed_abs, tag = 'smem constant byte address 0x4 - core index']
  #allocation1 [shape = 'u32[144,128]{1,0:T(1,128)}', space=vmem, size = 0x12000, scoped, tag = 'internal scratch']
  %s0 = inlined_call_operand.hbm [shape: f32[8,32], index: 0, kind: input, shape index: {}]
  %s1 = inlined_call_operand.hbm [shape: f32[32,256], index: 1, kind: input, shape index: {}]
  %s2 = inlined_call_operand.vmem [shape: f32[1,256], index: 2, kind: input, shape index: {}]
  %s3 = inlined_call_operand.hbm [shape: f32[8,128], index: 3, kind: input, shape index: {}]
  %s4 = inlined_call_operand.hbm [shape: f32[8,128], index: 4, kind: output, shape index: {}]
  %s5 = sld [smem:[#allocation0]]
  $region38: #{tpu_custom_call.1} parent=0
    _
  %s7 = ssub.s32 1, %s5
  %s8 = scalar_select 0, %s7, %s5
  $region1: #{tpu_custom_call.1} parent=0
    #allocation2 [shape = 'u8[4096]{0}', space=vmem, size = 0x1000, scoped, tag = 'input window, operand 0, single buffered']
    #allocation3 [shape = 's32[1]{0}', space=sflag, size = 0x4, scoped, tag = 'scoped memory for tpu_custom_call.1']
    #allocation4 [shape = 's32[1]{0}', space=sflag, size = 0x4, scoped, tag = 'scoped memory for tpu_custom_call.1']
    #allocation5 [shape = 'u8[32768]{0}', space=vmem, size = 0x8000, scoped, tag = 'input window, operand 1, single buffered']
    #allocation6 [shape = 's32[1]{0}', space=sflag, size = 0x4, scoped, tag = 'scoped memory for tpu_custom_call.1']
    #allocation7 [shape = 'u8[4096]{0}', space=vmem, size = 0x1000, scoped, tag = 'input window, operand 3, single buffered']
    #allocation8 [shape = 'u8[4096]{0}', space=vmem, size = 0x1000, scoped, tag = 'output window, operand 0, single buffered']
    %9 = vsyncpa [#allocation3], 0
    %10 = vsyncpa [#allocation6], 0
    %11 = vsyncpa [#allocation4], 0
    // Predicated region
    $region2: #{tpu_custom_call.1} parent=1 // pred_check
      _
    $region3: #{tpu_custom_call.1} parent=1 // pred_check_branch
      %13 = sbr.rel (0) target = $region5
    $region4: #{tpu_custom_call.1} parent=1 // pred_region
      %s15 = ssub.s32 128, 128
      %16 = vsyncadd [#allocation3], %s15
      %s18 = sshll.u32 [#allocation2], 4
      %s19 = int_to_ptr.vmem [resolvable:$true] %s18
      %21 = dma.hbm_to_vmem [thread:$0]  %s0, 128, %s19, [#allocation3]
    $region5: #{tpu_custom_call.1} parent=1 // pred_fallthru
      _
    // Predicated region
    $region6: #{tpu_custom_call.1} parent=1 // pred_check
      _
    $region7: #{tpu_custom_call.1} parent=1 // pred_check_branch
      %23 = sbr.rel (0) target = $region9
    $region8: #{tpu_custom_call.1} parent=1 // pred_region
      %s25 = ssub.s32 1024, 1024
      %26 = vsyncadd [#allocation6], %s25
      %s27 = sshll.u32 [#allocation5], 4
      %s28 = int_to_ptr.vmem [resolvable:$true] %s27
      %33 = dma.hbm_to_vmem [thread:$0]  %s1, 1024, %s28, [#allocation6], 256, 256, 16
    $region9: #{tpu_custom_call.1} parent=1 // pred_fallthru
      _
    // Predicated region
    $region10: #{tpu_custom_call.1} parent=1 // pred_check
      _
    $region11: #{tpu_custom_call.1} parent=1 // pred_check_branch
      %35 = sbr.rel (0) target = $region13
    $region12: #{tpu_custom_call.1} parent=1 // pred_region
      _
    $region13: #{tpu_custom_call.1} parent=1 // pred_fallthru
      _
    // Predicated region
    $region14: #{tpu_custom_call.1} parent=1 // pred_check
      _
    $region15: #{tpu_custom_call.1} parent=1 // pred_check_branch
      %37 = sbr.rel (0) target = $region17
    $region16: #{tpu_custom_call.1} parent=1 // pred_region
      %s39 = ssub.s32 128, 128
      %40 = vsyncadd [#allocation6], %s39
      %s42 = sshll.u32 [#allocation7], 4
      %s43 = int_to_ptr.vmem [resolvable:$true] %s42
      %45 = dma.hbm_to_vmem [thread:$0]  %s3, 128, %s43, [#allocation6]
    $region17: #{tpu_custom_call.1} parent=1 // pred_fallthru
      _
    // Predicated region
    $region18: #{tpu_custom_call.1} parent=1 // pred_check
      _
    $region19: #{tpu_custom_call.1} parent=1 // pred_check_branch
      %47 = sbr.rel (0) target = $region21
    $region20: #{tpu_custom_call.1} parent=1 // pred_region
      %48 = dma.done [#allocation3], 128
    $region21: #{tpu_custom_call.1} parent=1 // pred_fallthru
      _
    // Predicated region
    $region22: #{tpu_custom_call.1} parent=1 // pred_check
      _
    $region23: #{tpu_custom_call.1} parent=1 // pred_check_branch
      %50 = sbr.rel (0) target = $region25
    $region24: #{tpu_custom_call.1} parent=1 // pred_region
      %51 = dma.done [#allocation6], 1024
    $region25: #{tpu_custom_call.1} parent=1 // pred_fallthru
      _
    // Predicated region
    $region26: #{tpu_custom_call.1} parent=1 // pred_check
      _
    $region27: #{tpu_custom_call.1} parent=1 // pred_check_branch
      %53 = sbr.rel (0) target = $region29
    $region28: #{tpu_custom_call.1} parent=1 // pred_region
      %54 = dma.done [#allocation6], 128
    $region29: #{tpu_custom_call.1} parent=1 // pred_fallthru
      _
    %v55 = vld [vmem:[#allocation2] sm:$0xff]
    %v56 = vld [vmem:[#allocation5] sm:$0xff]
    %v57 = vld [vmem:[#allocation5 + $0x8] sm:$0xff]
    %v58 = vld [vmem:[#allocation5 + $0x10] sm:$0xff]
    %v59 = vld [vmem:[#allocation5 + $0x18] sm:$0xff]
    %v60 = vld [vmem:[#allocation5 + $0x20] sm:$0xff]
    %v61 = vld [vmem:[#allocation5 + $0x28] sm:$0xff]
    %v62 = vld [vmem:[#allocation5 + $0x30] sm:$0xff]
    %v63 = vld [vmem:[#allocation5 + $0x38] sm:$0xff]
    %v64 = vld [vmem:[%s2] sm:$0x3]
    %v66 = vlaneseq
    %v67 = vshrl.u32 %v66, 7
    %v68 = vsub.s32 0, %v67
    %v69 = vrot.slane %v64, %v68
    %v70 = vlaneseq
    %v71 = vshrl.u32 %v70, 7
    %v72 = vsub.s32 1, %v71
    %v73 = vrot.slane %v64, %v72
    %vm76 = vcmask 261120
    %v78 = vsel %vm76, %v55, 0
    %80 = vmatprep.subr.mxu0 0.0
    %81 = vmatpush1.msra.mxu0 0.0
    %82 = vmatprep.subr.mxu0 0.0
    %83 = vmatpush1.msra.mxu0 0.0
    %84 = vmatprep.subr.mxu0 0.0
    %85 = vmatpush1.msra.mxu0 0.0
    %86 = vmatprep.subr.mxu0 0.0
    %87 = vmatpush1.msra.mxu0 0.0
    %88 = vmatprep.subr.mxu0 0.0
    %89 = vmatpush1.msra.mxu0 0.0
    %90 = vmatprep.subr.mxu0 0.0
    %91 = vmatpush1.msra.mxu0 0.0
    %92 = vmatprep.subr.mxu0 0.0
    %93 = vmatpush1.msra.mxu0 0.0
    %94 = vmatprep.subr.mxu0 0.0
    %95 = vmatpush1.msra.mxu0 0.0
    %96 = vmatprep.subr.mxu0 0.0
    %97 = vmatpush1.msra.mxu0 0.0
    %98 = vmatprep.subr.mxu0 0.0
    %99 = vmatpush1.msra.mxu0 0.0
    %100 = vmatprep.subr.mxu0 0.0
    %101 = vmatpush1.msra.mxu0 0.0
    %102 = vmatprep.subr.mxu0 0.0
    %103 = vmatpush1.msra.mxu0 0.0
    %104 = vmatprep.subr.mxu0 %v63
    %105 = vmatpush1.msra.mxu0 %v62
    %106 = vmatprep.subr.mxu0 %v61
    %107 = vmatpush1.msra.mxu0 %v60
    %108 = vmatprep.subr.mxu0 %v59
    %109 = vmatpush1.msra.mxu0 %v58
    %110 = vmatprep.subr.mxu0 %v57
    %111 = vmatpush1.msra.mxu0 %v56
    %112 = vmatprep.subr.mxu0 0.0
    %113 = vmatpush2.msra.mxu0 0.0
    %114 = vmatprep.subr.mxu0 0.0
    %115 = vmatpush2.msra.mxu0 0.0
    %116 = vmatprep.subr.mxu0 0.0
    %117 = vmatpush2.msra.mxu0 0.0
    %118 = vmatprep.subr.mxu0 0.0
    %119 = vmatpush2.msra.mxu0 0.0
    %120 = vmatprep.subr.mxu0 0.0
    %121 = vmatpush2.msra.mxu0 0.0
    %122 = vmatprep.subr.mxu0 0.0
    %123 = vmatpush2.msra.mxu0 0.0
    %124 = vmatprep.subr.mxu0 0.0
    %125 = vmatpush2.msra.mxu0 0.0
    %126 = vmatprep.subr.mxu0 0.0
    %127 = vmatpush2.msra.mxu0 0.0
    %128 = vmatprep.subr.mxu0 0.0
    %129 = vmatpush2.msra.mxu0 0.0
    %130 = vmatprep.subr.mxu0 0.0
    %131 = vmatpush2.msra.mxu0 0.0
    %132 = vmatprep.subr.mxu0 0.0
    %133 = vmatpush2.msra.mxu0 0.0
    %134 = vmatprep.subr.mxu0 0.0
    %135 = vmatpush2.msra.mxu0 0.0
    %136 = vmatprep.subr.mxu0 0.0
    %137 = vmatpush2.msra.mxu0 0.0
    %138 = vmatprep.subr.mxu0 0.0
    %139 = vmatpush2.msra.mxu0 0.0
    %140 = vmatprep.subr.mxu0 0.0
    %141 = vmatpush2.msra.mxu0 0.0
    %142 = vmatprep.subr.mxu0 0.0
    %143 = vmatpush2.msra.mxu0 0.0
    %144 = vmatprep.mubr.f32.mxu0 0.0
    %145 = vmatmul.mubr.f32.gmra.mxu0 %v78
    %v146 = vpop.f32.mrf.mxu0
    %v147 = vadd.f32 %v69, %v146
    %v148 = vpop.f32.mrf.mxu0
    %v149 = vadd.f32 %v73, %v148
    %150 = vdwg.mxu0
    %v151 = vmul.f32 %v149, 1.442695
    %v152 = vpow.pop %v151
    %v153 = vld [vmem:[#allocation7] sm:$0xff]
    %v154 = vmul.f32 %v153, %v152
    %v155 = vadd.f32 %v154, %v147
    %156 = vst [vmem:[#allocation8] sm:$0xff] %v155
    // Predicated region
    $region30: #{tpu_custom_call.1} parent=1 // pred_check
      _
    $region31: #{tpu_custom_call.1} parent=1 // pred_check_branch
      %158 = sbr.rel (0) target = $region33
    $region32: #{tpu_custom_call.1} parent=1 // pred_region
      %s160 = ssub.s32 128, 128
      %161 = vsyncadd [#allocation4], %s160
      %s163 = sshll.u32 [#allocation8], 4
      %s164 = int_to_ptr.vmem [resolvable:$true] %s163
      %166 = dma.vmem_to_hbm [thread:$0]  %s164, 128, %s4, [#allocation4]
    $region33: #{tpu_custom_call.1} parent=1 // pred_fallthru
      _
    // Predicated region
    $region34: #{tpu_custom_call.1} parent=1 // pred_check
      _
    $region35: #{tpu_custom_call.1} parent=1 // pred_check_branch
      %168 = sbr.rel (0) target = $region37
    $region36: #{tpu_custom_call.1} parent=1 // pred_region
      %169 = dma.done [#allocation4], 128
    $region37: #{tpu_custom_call.1} parent=1 // pred_fallthru
      _
    %170 = vsyncpa [#allocation3], 1
    %171 = vsyncpa [#allocation6], 1
    %172 = vsyncpa [#allocation4], 1

</llo_original>
